<compile_context>
chip_gen: v7x
topology: tpu7x:2x2x1
jax: 0.10.0
libtpu: 0.0.40
codegen_flags: <defaults>
</compile_context>

<pallas_src>
import jax
import jax.numpy as jnp
from jax.experimental import pallas as pl
from jax.experimental.pallas import tpu as pltpu


def _mlp_g_kernel(x_ref, w1_ref, b1_ref, w2_ref, b2_ref, out_ref, h_ref):
    # fc1 + LeakyReLU(0.2): compute once per batch tile (res axis is the
    # innermost grid axis, so j == 0 is the first visit of this batch tile).
    @pl.when(pl.program_id(1) == 0)
    def _():
        h = (jnp.dot(x_ref[...], w1_ref[...],
                     preferred_element_type=jnp.float32)
             + b1_ref[...])
        h_ref[...] = jnp.where(h > 0, h, 0.2 * h)

    # fc2 (current resSize tile) + ReLU.
    o = (jnp.dot(h_ref[...].astype(w2_ref.dtype), w2_ref[...],
                 preferred_element_type=jnp.float32)
         + b2_ref[...])
    out_ref[...] = jnp.maximum(o, 0.0).astype(out_ref.dtype)


def mlp_g_forward(noise, att, w1, b1, w2, b2, *,
                  block_b=None, block_res=None,
                  compute_dtype=None, vmem_limit_bytes=None):
    """noise: [B, nz], att: [B, attSize]
       w1: [attSize+nz, ngh] (transposed vs. PyTorch), b1: [ngh]
       w2: [ngh, resSize],                              b2: [resSize]
    """
    B, nz = noise.shape
    _, att_size = att.shape
    in_dim, ngh = w1.shape
    assert in_dim == nz + att_size
    ngh2, res_size = w2.shape
    assert ngh2 == ngh

    out_dtype = noise.dtype
    if compute_dtype is None:
        compute_dtype = noise.dtype

    # cat(noise, att) folded into the wrapper -> one K = nz+att MXU dot.
    x = jnp.concatenate((noise, att), axis=1).astype(compute_dtype)
    w1c = w1.astype(compute_dtype)
    w2c = w2.astype(compute_dtype)
    b1_2d = b1.reshape(1, ngh).astype(jnp.float32)
    b2_2d = b2.reshape(1, res_size).astype(jnp.float32)

    # Batch tile: multiple of 8 (f32 sublane) or the full batch; capped so the
    # grid has several steps for pipelining / megacore at large B.
    if block_b is None:
        block_b = B if B <= 256 else 256
    # resSize tile: the full extent when small, else a 128-multiple slab so
    # stores stay lane-dense and w2 is sliced instead of fully resident.
    if block_res is None:
        block_res = res_size if res_size <= 2048 else 2048

    grid = (pl.cdiv(B, block_b), pl.cdiv(res_size, block_res))

    if vmem_limit_bytes is None:
        cb = jnp.dtype(compute_dtype).itemsize
        ob = jnp.dtype(out_dtype).itemsize
        est = (2 * block_b * in_dim * cb          # x tile (double-buffered)
               + 2 * in_dim * ngh * cb            # w1
               + 2 * ngh * block_res * cb         # w2 tile (double-buffered)
               + 2 * (ngh + block_res) * 4        # biases
               + 2 * block_b * block_res * ob     # out tile (double-buffered)
               + block_b * ngh * 4)               # h scratch (f32)
        vmem_limit_bytes = int(min(max(2 * est, 32 * 2**20), 64 * 2**20))

    return pl.pallas_call(
        _mlp_g_kernel,
        out_shape=jax.ShapeDtypeStruct((B, res_size), out_dtype),
        grid_spec=pltpu.PrefetchScalarGridSpec(
            num_scalar_prefetch=0,
            grid=grid,
            in_specs=[
                pl.BlockSpec((block_b, in_dim), lambda i, j: (i, 0)),
                pl.BlockSpec((in_dim, ngh), lambda i, j: (0, 0)),
                pl.BlockSpec((1, ngh), lambda i, j: (0, 0)),
                pl.BlockSpec((ngh, block_res), lambda i, j: (0, j)),
                pl.BlockSpec((1, block_res), lambda i, j: (0, j)),
            ],
            out_specs=pl.BlockSpec((block_b, block_res), lambda i, j: (i, j)),
            scratch_shapes=[pltpu.VMEM((block_b, ngh), jnp.float32)],
        ),
        compiler_params=pltpu.CompilerParams(
            dimension_semantics=("parallel", "arbitrary"),
            vmem_limit_bytes=vmem_limit_bytes),
    )(x, w1c, b1_2d, w2c, b2_2d)


def init_params(key, att_size, nz, ngh, res_size, dtype=jnp.float32):
    """weights_init: Linear weights ~ N(0, 0.02), biases = 0."""
    k1, k2 = jax.random.split(key)
    w1 = 0.02 * jax.random.normal(k1, (att_size + nz, ngh), dtype)
    b1 = jnp.zeros((ngh,), dtype)
    w2 = 0.02 * jax.random.normal(k2, (ngh, res_size), dtype)
    b2 = jnp.zeros((res_size,), dtype)
    return w1, b1, w2, b2


def reference_forward(noise, att, w1, b1, w2, b2):
    h = jnp.concatenate((noise, att), axis=1) @ w1 + b1
    h = jnp.where(h > 0, h, 0.2 * h)
    h = h @ w2 + b2
    return jnp.maximum(h, 0.0)


if __name__ == "__main__":
    key = jax.random.PRNGKey(0)

    # Case 1: small module-consistent shapes (attSize=16, nz=16, ngh=64,
    #         resSize=128, batch=8): single grid step.
    # Case 2: batch & res both tiled: exercises the pipelined 2-D grid and
    #         the pl.when(j == 0) h-scratch reuse path.
    cases = [
        dict(att_size=16, nz=16, ngh=64, res_size=128, batch=8,
             block_b=None, block_res=None),
        dict(att_size=16, nz=16, ngh=64, res_size=256, batch=64,
             block_b=16, block_res=128),
    ]
    for c in cases:
        key, k_n, k_a, k_p = jax.random.split(key, 4)
        noise = jax.random.normal(k_n, (c["batch"], c["nz"]), jnp.float32)
        att = jax.random.normal(k_a, (c["batch"], c["att_size"]), jnp.float32)
        w1, b1, w2, b2 = init_params(k_p, c["att_size"], c["nz"],
                                     c["ngh"], c["res_size"])

        out = mlp_g_forward(noise, att, w1, b1, w2, b2,
                            block_b=c["block_b"], block_res=c["block_res"])
        out = jax.block_until_ready(out)
        ref = reference_forward(noise, att, w1, b1, w2, b2)
        assert out.shape == ref.shape
        assert jnp.allclose(out, ref, atol=1e-5, rtol=1e-5)

        # bf16 compute path (MXU-native inputs, f32 accumulation).
        out_bf16 = mlp_g_forward(noise, att, w1, b1, w2, b2,
                                 block_b=c["block_b"],
                                 block_res=c["block_res"],
                                 compute_dtype=jnp.bfloat16)
        out_bf16 = jax.block_until_ready(out_bf16)
        assert jnp.allclose(out_bf16.astype(jnp.float32), ref,
                            atol=2e-2, rtol=1e-1)

    print("KERNEL_OK")
</pallas_src>

<mosaic_0001>
module attributes {stable_mosaic.version = 11 : i64} {
  func.func @_mlp_g_kernel(%arg0: i32, %arg1: i32, %arg2: memref<8x32xf32, #tpu.memory_space<vmem>>, %arg3: memref<32x64xf32, #tpu.memory_space<vmem>>, %arg4: memref<1x64xf32, #tpu.memory_space<vmem>>, %arg5: memref<64x128xf32, #tpu.memory_space<vmem>>, %arg6: memref<1x128xf32, #tpu.memory_space<vmem>>, %arg7: memref<8x128xf32, #tpu.memory_space<vmem>>, %arg8: memref<8x64xf32, #tpu.memory_space<vmem>>) attributes {dimension_semantics = [#tpu.dimension_semantics<parallel>, #tpu.dimension_semantics<arbitrary>], iteration_bounds = array<i64: 1, 1>, scalar_prefetch = 0 : i64, scratch_operands = 1 : i64, tpu.core_type = #tpu.core_type<tc>, window_params = [{transform_indices = @transform_0, window_bounds = array<i64: 8, 32>}, {pipeline_mode = #tpu.pipeline_mode<synchronous>, transform_indices = @transform_1, window_bounds = array<i64: 32, 64>}, {pipeline_mode = #tpu.pipeline_mode<synchronous>, transform_indices = @transform_2, window_bounds = array<i64: 1, 64>}, {transform_indices = @transform_3, window_bounds = array<i64: 64, 128>}, {transform_indices = @transform_4, window_bounds = array<i64: 1, 128>}, {transform_indices = @transform_5, window_bounds = array<i64: 8, 128>}]} {
    %c0_i32 = arith.constant 0 : i32
    %0 = arith.cmpi eq, %arg1, %c0_i32 : i32
    %1 = arith.extui %0 : i1 to i32
    %c0_i32_0 = arith.constant 0 : i32
    %2 = arith.cmpi ne, %1, %c0_i32_0 : i32
    scf.if %2 {
      %c0_9 = arith.constant 0 : index
      %c0_10 = arith.constant 0 : index
      %12 = vector.load %arg2[%c0_9, %c0_10] : memref<8x32xf32, #tpu.memory_space<vmem>>, vector<8x32xf32>
      %c0_11 = arith.constant 0 : index
      %c0_12 = arith.constant 0 : index
      %13 = vector.load %arg3[%c0_11, %c0_12] : memref<32x64xf32, #tpu.memory_space<vmem>>, vector<32x64xf32>
      %cst_13 = arith.constant dense<0.000000e+00> : vector<8x64xf32>
      %14 = tpu.matmul %12, %13, %cst_13 {dimension_numbers = #tpu.dot_dimension_numbers<[1], [0], [0], [1], [0, 0, 1, 1], [], []>} : vector<8x32xf32>, vector<32x64xf32>, vector<8x64xf32> -> vector<8x64xf32>
      %c0_14 = arith.constant 0 : index
      %c0_15 = arith.constant 0 : index
      %15 = vector.load %arg4[%c0_14, %c0_15] : memref<1x64xf32, #tpu.memory_space<vmem>>, vector<1x64xf32>
      %16 = vector.broadcast %15 : vector<1x64xf32> to vector<8x64xf32>
      %17 = arith.addf %14, %16 : vector<8x64xf32>
      %cst_16 = arith.constant 0.000000e+00 : f32
      %18 = vector.broadcast %cst_16 : f32 to vector<8x64xf32>
      %19 = arith.cmpf ogt, %17, %18 : vector<8x64xf32>
      %cst_17 = arith.constant 2.000000e-01 : f32
      %20 = vector.broadcast %cst_17 : f32 to vector<8x64xf32>
      %21 = arith.mulf %20, %17 : vector<8x64xf32>
      %22 = arith.select %19, %17, %21 : vector<8x64xi1>, vector<8x64xf32>
      %c0_18 = arith.constant 0 : index
      %c0_19 = arith.constant 0 : index
      %23 = vector.load %arg8[%c0_18, %c0_19] : memref<8x64xf32, #tpu.memory_space<vmem>>, vector<8x64xf32>
      tpu.vector_store %arg8[%c0_18, %c0_19], %22 {strides = array<i32>} : memref<8x64xf32, #tpu.memory_space<vmem>>, vector<8x64xf32>,
    } else {
    }
    %c0 = arith.constant 0 : index
    %c0_1 = arith.constant 0 : index
    %3 = vector.load %arg8[%c0, %c0_1] : memref<8x64xf32, #tpu.memory_space<vmem>>, vector<8x64xf32>
    %c0_2 = arith.constant 0 : index
    %c0_3 = arith.constant 0 : index
    %4 = vector.load %arg5[%c0_2, %c0_3] : memref<64x128xf32, #tpu.memory_space<vmem>>, vector<64x128xf32>
    %cst = arith.constant dense<0.000000e+00> : vector<8x128xf32>
    %5 = tpu.matmul %3, %4, %cst {dimension_numbers = #tpu.dot_dimension_numbers<[1], [0], [0], [1], [0, 0, 1, 1], [], []>} : vector<8x64xf32>, vector<64x128xf32>, vector<8x128xf32> -> vector<8x128xf32>
    %c0_4 = arith.constant 0 : index
    %c0_5 = arith.constant 0 : index
    %6 = vector.load %arg6[%c0_4, %c0_5] : memref<1x128xf32, #tpu.memory_space<vmem>>, vector<1x128xf32>
    %7 = vector.broadcast %6 : vector<1x128xf32> to vector<8x128xf32>
    %8 = arith.addf %5, %7 : vector<8x128xf32>
    %cst_6 = arith.constant 0.000000e+00 : f32
    %9 = vector.broadcast %cst_6 : f32 to vector<8x128xf32>
    %10 = arith.maximumf %8, %9 : vector<8x128xf32>
    %c0_7 = arith.constant 0 : index
    %c0_8 = arith.constant 0 : index
    %11 = vector.load %arg7[%c0_7, %c0_8] : memref<8x128xf32, #tpu.memory_space<vmem>>, vector<8x128xf32>
    tpu.vector_store %arg7[%c0_7, %c0_8], %10 {strides = array<i32>} : memref<8x128xf32, #tpu.memory_space<vmem>>, vector<8x128xf32>,
    return
  }
  func.func @transform_0(%arg0: i32, %arg1: i32) -> (i32, i32) {
    %c0_i32 = arith.constant 0 : i32
    %c0_i32_0 = arith.constant 0 : i32
    return %arg0, %c0_i32 : i32, i32
  }
  func.func @transform_1(%arg0: i32, %arg1: i32) -> (i32, i32) {
    %c0_i32 = arith.constant 0 : i32
    %c0_i32_0 = arith.constant 0 : i32
    %c0_i32_1 = arith.constant 0 : i32
    return %c0_i32, %c0_i32_0 : i32, i32
  }
  func.func @transform_2(%arg0: i32, %arg1: i32) -> (i32, i32) {
    %c0_i32 = arith.constant 0 : i32
    %c0_i32_0 = arith.constant 0 : i32
    %c0_i32_1 = arith.constant 0 : i32
    return %c0_i32, %c0_i32_0 : i32, i32
  }
  func.func @transform_3(%arg0: i32, %arg1: i32) -> (i32, i32) {
    %c0_i32 = arith.constant 0 : i32
    %c0_i32_0 = arith.constant 0 : i32
    return %c0_i32, %arg1 : i32, i32
  }
  func.func @transform_4(%arg0: i32, %arg1: i32) -> (i32, i32) {
    %c0_i32 = arith.constant 0 : i32
    %c0_i32_0 = arith.constant 0 : i32
    return %c0_i32, %arg1 : i32, i32
  }
  func.func @transform_5(%arg0: i32, %arg1: i32) -> (i32, i32) {
    %c0_i32 = arith.constant 0 : i32
    return %arg0, %arg1 : i32, i32
  }
}

</mosaic_0001>

<llo_original>
// kernel: tpu_custom_call.1
$region0: #{tpu_custom_call.1}
  #allocation0 [shape = 'u32[]', space=smem, size = 0x4, offset = 0x4, fixed_abs, tag = 'smem constant byte address 0x4 - core index']
  #allocation1 [shape = 'u32[144,128]{1,0:T(1,128)}', space=vmem, size = 0x12000, scoped, tag = 'internal scratch']
  #allocation2 [shape = 'f32[8,64]{1,0:T(8,128)}', space=vmem, size = 0x1000, scoped, tag = 'scratch operand']
  %s0 = inlined_call_operand.hbm [shape: f32[8,32], index: 0, kind: input, shape index: {}]
  %s1 = inlined_call_operand.hbm [shape: f32[32,64], index: 1, kind: input, shape index: {}]
  %s2 = inlined_call_operand.vmem [shape: f32[1,64], index: 2, kind: input, shape index: {}]
  %s3 = inlined_call_operand.hbm [shape: f32[64,128], index: 3, kind: input, shape index: {}]
  %s4 = inlined_call_operand.vmem [shape: f32[1,128], index: 4, kind: input, shape index: {}]
  %s5 = inlined_call_operand.hbm [shape: f32[8,128], index: 5, kind: output, shape index: {}]
  %s6 = sld [smem:[#allocation0]]
  $region46: #{tpu_custom_call.1} parent=0
    _
  %s8 = ssub.s32 1, %s6
  %s9 = scalar_select 0, %s8, %s6
  $region1: #{tpu_custom_call.1} parent=0
    #allocation3 [shape = 'u8[4096]{0}', space=vmem, size = 0x1000, scoped, tag = 'input window, operand 0, single buffered']
    #allocation4 [shape = 's32[1]{0}', space=sflag, size = 0x4, scoped, tag = 'scoped memory for tpu_custom_call.1']
    #allocation5 [shape = 's32[1]{0}', space=sflag, size = 0x4, scoped, tag = 'scoped memory for tpu_custom_call.1']
    #allocation6 [shape = 'u8[16384]{0}', space=vmem, size = 0x4000, scoped, tag = 'input window, operand 1, single buffered']
    #allocation7 [shape = 's32[1]{0}', space=sflag, size = 0x4, scoped, tag = 'scoped memory for tpu_custom_call.1']
    #allocation8 [shape = 'u8[32768]{0}', space=vmem, size = 0x8000, scoped, tag = 'input window, operand 3, single buffered']
    #allocation9 [shape = 'u8[4096]{0}', space=vmem, size = 0x1000, scoped, tag = 'output window, operand 0, single buffered']
    %10 = vsyncpa [#allocation4], 0
    %11 = vsyncpa [#allocation7], 0
    %12 = vsyncpa [#allocation5], 0
    // Predicated region
    $region2: #{tpu_custom_call.1} parent=1 // pred_check
      _
    $region3: #{tpu_custom_call.1} parent=1 // pred_check_branch
      %14 = sbr.rel (0) target = $region5
    $region4: #{tpu_custom_call.1} parent=1 // pred_region
      %s16 = ssub.s32 128, 128
      %17 = vsyncadd [#allocation4], %s16
      %s19 = sshll.u32 [#allocation3], 4
      %s20 = int_to_ptr.vmem [resolvable:$true] %s19
      %22 = dma.hbm_to_vmem [thread:$0]  %s0, 128, %s20, [#allocation4]
    $region5: #{tpu_custom_call.1} parent=1 // pred_fallthru
      _
    // Predicated region
    $region6: #{tpu_custom_call.1} parent=1 // pred_check
      _
    $region7: #{tpu_custom_call.1} parent=1 // pred_check_branch
      %24 = sbr.rel (0) target = $region9
    $region8: #{tpu_custom_call.1} parent=1 // pred_region
      %s26 = ssub.s32 512, 512
      %27 = vsyncadd [#allocation7], %s26
      %s28 = sshll.u32 [#allocation6], 4
      %s29 = int_to_ptr.vmem [resolvable:$true] %s28
      %34 = dma.hbm_to_vmem [thread:$0]  %s1, 512, %s29, [#allocation7], 128, 128, 8
    $region9: #{tpu_custom_call.1} parent=1 // pred_fallthru
      _
    // Predicated region
    $region10: #{tpu_custom_call.1} parent=1 // pred_check
      _
    $region11: #{tpu_custom_call.1} parent=1 // pred_check_branch
      %36 = sbr.rel (0) target = $region13
    $region12: #{tpu_custom_call.1} parent=1 // pred_region
      _
    $region13: #{tpu_custom_call.1} parent=1 // pred_fallthru
      _
    // Predicated region
    $region14: #{tpu_custom_call.1} parent=1 // pred_check
      _
    $region15: #{tpu_custom_call.1} parent=1 // pred_check_branch
      %38 = sbr.rel (0) target = $region17
    $region16: #{tpu_custom_call.1} parent=1 // pred_region
      %s40 = ssub.s32 1024, 1024
      %41 = vsyncadd [#allocation7], %s40
      %s42 = sshll.u32 [#allocation8], 4
      %s43 = int_to_ptr.vmem [resolvable:$true] %s42
      %48 = dma.hbm_to_vmem [thread:$0]  %s3, 1024, %s43, [#allocation7], 128, 128, 8
    $region17: #{tpu_custom_call.1} parent=1 // pred_fallthru
      _
    // Predicated region
    $region18: #{tpu_custom_call.1} parent=1 // pred_check
      _
    $region19: #{tpu_custom_call.1} parent=1 // pred_check_branch
      %50 = sbr.rel (0) target = $region21
    $region20: #{tpu_custom_call.1} parent=1 // pred_region
      _
    $region21: #{tpu_custom_call.1} parent=1 // pred_fallthru
      _
    // Predicated region
    $region22: #{tpu_custom_call.1} parent=1 // pred_check
      _
    $region23: #{tpu_custom_call.1} parent=1 // pred_check_branch
      %52 = sbr.rel (0) target = $region25
    $region24: #{tpu_custom_call.1} parent=1 // pred_region
      %53 = dma.done [#allocation4], 128
    $region25: #{tpu_custom_call.1} parent=1 // pred_fallthru
      _
    // Predicated region
    $region26: #{tpu_custom_call.1} parent=1 // pred_check
      _
    $region27: #{tpu_custom_call.1} parent=1 // pred_check_branch
      %55 = sbr.rel (0) target = $region29
    $region28: #{tpu_custom_call.1} parent=1 // pred_region
      %56 = dma.done [#allocation7], 512
    $region29: #{tpu_custom_call.1} parent=1 // pred_fallthru
      _
    // Predicated region
    $region30: #{tpu_custom_call.1} parent=1 // pred_check
      _
    $region31: #{tpu_custom_call.1} parent=1 // pred_check_branch
      %58 = sbr.rel (0) target = $region33
    $region32: #{tpu_custom_call.1} parent=1 // pred_region
      %59 = dma.done [#allocation7], 1024
    $region33: #{tpu_custom_call.1} parent=1 // pred_fallthru
      _
    %p60 = scmp.eq.s32.totalorder 0, 0
    // Predicated region
    $region34: #{tpu_custom_call.1} parent=1 // pred_check
      %p61 = pneg %p60
    $region35: #{tpu_custom_call.1} parent=1 // pred_check_branch
      %63 = sbr.rel (%p61) target = $region37
    $region36: #{tpu_custom_call.1} parent=1 // pred_region
      %v64 = vld [vmem:[#allocation3] sm:$0xff]
      %v65 = vld [vmem:[#allocation6] sm:$0xff]
      %v66 = vld [vmem:[#allocation6 + $0x8] sm:$0xff]
      %v67 = vld [vmem:[#allocation6 + $0x10] sm:$0xff]
      %v68 = vld [vmem:[#allocation6 + $0x18] sm:$0xff]
      %v69 = vld [vmem:[%s2] sm:$0x1]
      %v71 = vlaneseq
      %v72 = vshrl.u32 %v71, 7
      %v73 = vsub.s32 0, %v72
      %v74 = vrot.slane %v69, %v73
      %vm76 = vcmask 261120
      %v78 = vsel %vm76, %v64, 0
      %80 = vmatprep.subr.mxu0 0.0
      %81 = vmatpush1.msra.mxu0 %v65
      %82 = vmatprep.subr.mxu0 0.0
      %83 = vmatpush1.msra.mxu0 %v66
      %84 = vmatprep.subr.mxu0 0.0
      %85 = vmatpush1.msra.mxu0 %v67
      %86 = vmatprep.subr.mxu0 0.0
      %87 = vmatpush1.msra.mxu0 %v68
      %88 = vmatprep.subr.mxu0 0.0
      %89 = vmatpush1.msra.mxu0 0.0
      %90 = vmatprep.subr.mxu0 0.0
      %91 = vmatpush1.msra.mxu0 0.0
      %92 = vmatprep.subr.mxu0 0.0
      %93 = vmatpush1.msra.mxu0 0.0
      %94 = vmatprep.subr.mxu0 0.0
      %95 = vmatpush1.msra.mxu0 0.0
      %96 = vmatprep.subr.mxu0 0.0
      %97 = vmatpush1.msra.mxu0 0.0
      %98 = vmatprep.subr.mxu0 0.0
      %99 = vmatpush1.msra.mxu0 0.0
      %100 = vmatprep.subr.mxu0 0.0
      %101 = vmatpush1.msra.mxu0 0.0
      %102 = vmatprep.subr.mxu0 0.0
      %103 = vmatpush1.msra.mxu0 0.0
      %104 = vmatprep.subr.mxu0 0.0
      %105 = vmatpush1.msra.mxu0 0.0
      %106 = vmatprep.subr.mxu0 0.0
      %107 = vmatpush1.msra.mxu0 0.0
      %108 = vmatprep.subr.mxu0 0.0
      %109 = vmatpush1.msra.mxu0 0.0
      %110 = vmatprep.subr.mxu0 0.0
      %111 = vmatpush1.msra.mxu0 0.0
      %112 = vmatprep.subr.mxu0 0.0
      %113 = vmatpush1.msra.mxu0 0.0
      %114 = vmatprep.subr.mxu0 0.0
      %115 = vmatpush1.msra.mxu0 0.0
      %116 = vmatprep.subr.mxu0 0.0
      %117 = vmatpush1.msra.mxu0 0.0
      %118 = vmatprep.subr.mxu0 0.0
      %119 = vmatpush1.msra.mxu0 0.0
      %120 = vmatprep.subr.mxu0 0.0
      %121 = vmatpush1.msra.mxu0 0.0
      %122 = vmatprep.subr.mxu0 0.0
      %123 = vmatpush1.msra.mxu0 0.0
      %124 = vmatprep.subr.mxu0 0.0
      %125 = vmatpush1.msra.mxu0 0.0
      %126 = vmatprep.subr.mxu0 0.0
      %127 = vmatpush1.msra.mxu0 0.0
      %128 = vmatprep.subr.mxu0 0.0
      %129 = vmatpush1.msra.mxu0 0.0
      %130 = vmatprep.subr.mxu0 0.0
      %131 = vmatpush1.msra.mxu0 0.0
      %132 = vmatprep.subr.mxu0 0.0
      %133 = vmatpush1.msra.mxu0 0.0
      %134 = vmatprep.subr.mxu0 0.0
      %135 = vmatpush1.msra.mxu0 0.0
      %136 = vmatprep.subr.mxu0 0.0
      %137 = vmatpush1.msra.mxu0 0.0
      %138 = vmatprep.subr.mxu0 0.0
      %139 = vmatpush1.msra.mxu0 0.0
      %140 = vmatprep.subr.mxu0 0.0
      %141 = vmatpush1.msra.mxu0 0.0
      %142 = vmatprep.subr.mxu0 0.0
      %143 = vmatpush1.msra.mxu0 0.0
      %144 = vmatprep.mubr.f32.mxu0 0.0
      %145 = vmatmul.mubr.f32.gmra.mrb[0].mxu0 %v78
      %v146 = vpop.f32.mrb[0].mxu0
      %v147 = vadd.f32 %v74, %v146
      %v148 = vpop.f32.mrb[0].mxu0
      %149 = vdwg.mxu0
      %vm150 = vcmp.gt.f32.partialorder %v147, 0.0
      %v151 = vmul.f32 %v147, 0.2
      %v152 = vsel %vm150, %v147, %v151
      %vm153 = vcmask 523264
      %154 = vst.msk [vmem:[#allocation2] sm:$0xff] %vm153, %v152
    $region37: #{tpu_custom_call.1} parent=1 // pred_fallthru
      _
    %v155 = vld [vmem:[#allocation2] sm:$0xff]
    %v156 = vld [vmem:[#allocation8] sm:$0xff]
    %v157 = vld [vmem:[#allocation8 + $0x8] sm:$0xff]
    %v158 = vld [vmem:[#allocation8 + $0x10] sm:$0xff]
    %v159 = vld [vmem:[#allocation8 + $0x18] sm:$0xff]
    %v160 = vld [vmem:[#allocation8 + $0x20] sm:$0xff]
    %v161 = vld [vmem:[#allocation8 + $0x28] sm:$0xff]
    %v162 = vld [vmem:[#allocation8 + $0x30] sm:$0xff]
    %v163 = vld [vmem:[#allocation8 + $0x38] sm:$0xff]
    %v164 = vld [vmem:[%s4] sm:$0x1]
    %v166 = vlaneseq
    %v167 = vshrl.u32 %v166, 7
    %v168 = vsub.s32 0, %v167
    %v169 = vrot.slane %v164, %v168
    %vm171 = vcmask 523264
    %v173 = vsel %vm171, %v155, 0
    %175 = vmatprep.subr.mxu0 0.0
    %176 = vmatpush1.msra.mxu0 %v156
    %177 = vmatprep.subr.mxu0 0.0
    %178 = vmatpush1.msra.mxu0 %v157
    %179 = vmatprep.subr.mxu0 0.0
    %180 = vmatpush1.msra.mxu0 %v158
    %181 = vmatprep.subr.mxu0 0.0
    %182 = vmatpush1.msra.mxu0 %v159
    %183 = vmatprep.subr.mxu0 0.0
    %184 = vmatpush1.msra.mxu0 %v160
    %185 = vmatprep.subr.mxu0 0.0
    %186 = vmatpush1.msra.mxu0 %v161
    %187 = vmatprep.subr.mxu0 0.0
    %188 = vmatpush1.msra.mxu0 %v162
    %189 = vmatprep.subr.mxu0 0.0
    %190 = vmatpush1.msra.mxu0 %v163
    %191 = vmatprep.subr.mxu0 0.0
    %192 = vmatpush1.msra.mxu0 0.0
    %193 = vmatprep.subr.mxu0 0.0
    %194 = vmatpush1.msra.mxu0 0.0
    %195 = vmatprep.subr.mxu0 0.0
    %196 = vmatpush1.msra.mxu0 0.0
    %197 = vmatprep.subr.mxu0 0.0
    %198 = vmatpush1.msra.mxu0 0.0
    %199 = vmatprep.subr.mxu0 0.0
    %200 = vmatpush1.msra.mxu0 0.0
    %201 = vmatprep.subr.mxu0 0.0
    %202 = vmatpush1.msra.mxu0 0.0
    %203 = vmatprep.subr.mxu0 0.0
    %204 = vmatpush1.msra.mxu0 0.0
    %205 = vmatprep.subr.mxu0 0.0
    %206 = vmatpush1.msra.mxu0 0.0
    %207 = vmatprep.subr.mxu0 0.0
    %208 = vmatpush1.msra.mxu0 0.0
    %209 = vmatprep.subr.mxu0 0.0
    %210 = vmatpush1.msra.mxu0 0.0
    %211 = vmatprep.subr.mxu0 0.0
    %212 = vmatpush1.msra.mxu0 0.0
    %213 = vmatprep.subr.mxu0 0.0
    %214 = vmatpush1.msra.mxu0 0.0
    %215 = vmatprep.subr.mxu0 0.0
    %216 = vmatpush1.msra.mxu0 0.0
    %217 = vmatprep.subr.mxu0 0.0
    %218 = vmatpush1.msra.mxu0 0.0
    %219 = vmatprep.subr.mxu0 0.0
    %220 = vmatpush1.msra.mxu0 0.0
    %221 = vmatprep.subr.mxu0 0.0
    %222 = vmatpush1.msra.mxu0 0.0
    %223 = vmatprep.subr.mxu0 0.0
    %224 = vmatpush1.msra.mxu0 0.0
    %225 = vmatprep.subr.mxu0 0.0
    %226 = vmatpush1.msra.mxu0 0.0
    %227 = vmatprep.subr.mxu0 0.0
    %228 = vmatpush1.msra.mxu0 0.0
    %229 = vmatprep.subr.mxu0 0.0
    %230 = vmatpush1.msra.mxu0 0.0
    %231 = vmatprep.subr.mxu0 0.0
    %232 = vmatpush1.msra.mxu0 0.0
    %233 = vmatprep.subr.mxu0 0.0
    %234 = vmatpush1.msra.mxu0 0.0
    %235 = vmatprep.subr.mxu0 0.0
    %236 = vmatpush1.msra.mxu0 0.0
    %237 = vmatprep.subr.mxu0 0.0
    %238 = vmatpush1.msra.mxu0 0.0
    %239 = vmatprep.mubr.f32.mxu0 0.0
    %240 = vmatmul.mubr.f32.gmra.mrb[0].mxu0 %v173
    %v241 = vpop.f32.mrb[0].mxu0
    %v242 = vadd.f32 %v169, %v241
    %v243 = vpop.f32.mrb[0].mxu0
    %244 = vdwg.mxu0
    %v245 = vmax.f32 %v242, 0.0
    %246 = vst [vmem:[#allocation9] sm:$0xff] %v245
    // Predicated region
    $region38: #{tpu_custom_call.1} parent=1 // pred_check
      _
    $region39: #{tpu_custom_call.1} parent=1 // pred_check_branch
      %248 = sbr.rel (0) target = $region41
    $region40: #{tpu_custom_call.1} parent=1 // pred_region
      %s250 = ssub.s32 128, 128
      %251 = vsyncadd [#allocation5], %s250
      %s253 = sshll.u32 [#allocation9], 4
      %s254 = int_to_ptr.vmem [resolvable:$true] %s253
      %256 = dma.vmem_to_hbm [thread:$0]  %s254, 128, %s5, [#allocation5]
    $region41: #{tpu_custom_call.1} parent=1 // pred_fallthru
      _
    // Predicated region
    $region42: #{tpu_custom_call.1} parent=1 // pred_check
      _
    $region43: #{tpu_custom_call.1} parent=1 // pred_check_branch
      %258 = sbr.rel (0) target = $region45
    $region44: #{tpu_custom_call.1} parent=1 // pred_region
      %259 = dma.done [#allocation5], 128
    $region45: #{tpu_custom_call.1} parent=1 // pred_fallthru
      _
    %260 = vsyncpa [#allocation4], 1
    %261 = vsyncpa [#allocation7], 1
    %262 = vsyncpa [#allocation5], 1

</llo_original>
